<compile_context>
chip_gen: v5e
topology: v5e:2x2
jax: 0.10.0
libtpu: 0.0.40
codegen_flags: <defaults>
</compile_context>

<pallas_src>
import math

import jax
import jax.numpy as jnp
from jax.experimental import pallas as pl
from jax.experimental.pallas import tpu as pltpu


# ------------------------------ fused kernel --------------------------------


def fused_dgi_kernel(
    u_idx_ref, i_idx_ref,                 # [B, 1] int32 gather indices
    user_ref, item_ref,                   # [N_u, H], [N_i, H] real features
    fuser_ref, fitem_ref,                 # fake features
    uv_ref, vu_ref, cuv_ref, cvu_ref,     # adjacencies
    w_lin_ref, b_lin_ref,                 # lin:     [2H, H], [1, H]
    w_sub_ref, b_sub_ref,                 # lin_sub: [2H, H], [1, H]
    wg_u_ref, bg_u_ref, wg_i_ref, bg_i_ref,  # GAT stand-in weights (shared)
    out_ref,                              # [2B, H]: rows 0..B-1 real, B..2B-1 fake
):
    n_u = user_ref.shape[0]
    n_i = item_ref.shape[0]
    b_sz = u_idx_ref.shape[0]
    f32 = jnp.float32

    # ---- AvgReadout over users & items, one [1,2H]@[2H,H] Linear, sigmoid ----
    s_u = jnp.mean(user_ref[...], axis=0, keepdims=True)            # [1, H]
    s_i = jnp.mean(item_ref[...], axis=0, keepdims=True)            # [1, H]
    s_cat = jnp.concatenate([s_u, s_i], axis=1)                     # [1, 2H]
    s_two = jax.nn.sigmoid(
        jnp.dot(s_cat, w_lin_ref[...], preferred_element_type=f32)
        + b_lin_ref[...])                                           # [1, H]

    # ---- gather-before-GAT: select the B adjacency rows via exact one-hot ----
    iota_u = jax.lax.broadcasted_iota(jnp.int32, (b_sz, n_u), 1)
    iota_i = jax.lax.broadcasted_iota(jnp.int32, (b_sz, n_i), 1)
    oh_u = (u_idx_ref[...] == iota_u).astype(f32)                   # [B, N_u]
    oh_i = (i_idx_ref[...] == iota_i).astype(f32)                   # [B, N_i]

    sel_uv = jnp.dot(oh_u, uv_ref[...], preferred_element_type=f32)    # [B, N_i]
    sel_cuv = jnp.dot(oh_u, cuv_ref[...], preferred_element_type=f32)  # [B, N_i]
    sel_vu = jnp.dot(oh_i, vu_ref[...], preferred_element_type=f32)    # [B, N_u]
    sel_cvu = jnp.dot(oh_i, cvu_ref[...], preferred_element_type=f32)  # [B, N_u]

    # ---- neighborhood aggregation on the gathered rows only; stack real/fake
    #      along sublanes so each shared GAT weight is multiplied once --------
    agg_u = jnp.concatenate(
        [jnp.dot(sel_uv, item_ref[...], preferred_element_type=f32),
         jnp.dot(sel_cuv, fitem_ref[...], preferred_element_type=f32)],
        axis=0)                                                     # [2B, H]
    agg_i = jnp.concatenate(
        [jnp.dot(sel_vu, user_ref[...], preferred_element_type=f32),
         jnp.dot(sel_cvu, fuser_ref[...], preferred_element_type=f32)],
        axis=0)                                                     # [2B, H]

    u_feat = jnp.maximum(
        jnp.dot(agg_u, wg_u_ref[...], preferred_element_type=f32) + bg_u_ref[...],
        0.0)                                                        # [2B, H]
    i_feat = jnp.maximum(
        jnp.dot(agg_i, wg_i_ref[...], preferred_element_type=f32) + bg_i_ref[...],
        0.0)                                                        # [2B, H]

    # ---- lin_sub as one wide-K matmul, sigmoid, single S_Two mixup ----------
    ui = jnp.concatenate([u_feat, i_feat], axis=1)                  # [2B, 2H]
    z = jnp.dot(ui, w_sub_ref[...], preferred_element_type=f32) + b_sub_ref[...]
    s_two_b = jnp.broadcast_to(s_two, z.shape)                      # broadcast once
    out_ref[...] = s_two_b * jax.nn.sigmoid(z)                      # [2B, H]


# ------------------------------ thin wrapper ---------------------------------

_VMEM = pl.BlockSpec(memory_space=pltpu.MemorySpace.VMEM)


def my_dgi_forward(params,
                   user_hidden_out, item_hidden_out,
                   fake_user_hidden_out, fake_item_hidden_out,
                   UV_adj, VU_adj, CUV_adj, CVU_adj,
                   user_One, item_One):
    b = user_One.shape[0]
    h = user_hidden_out.shape[1]
    u_idx = user_One.astype(jnp.int32).reshape(b, 1)
    i_idx = item_One.astype(jnp.int32).reshape(b, 1)

    out = pl.pallas_call(
        fused_dgi_kernel,
        out_shape=jax.ShapeDtypeStruct((2 * b, h), jnp.float32),
        in_specs=[_VMEM] * 18,
        out_specs=_VMEM,
    )(u_idx, i_idx,
      user_hidden_out, item_hidden_out,
      fake_user_hidden_out, fake_item_hidden_out,
      UV_adj, VU_adj, CUV_adj, CVU_adj,
      params["w_lin"], params["b_lin"],
      params["w_sub"], params["b_sub"],
      params["wg_u"], params["bg_u"],
      params["wg_i"], params["bg_i"])

    mixup_real = out[:b]
    mixup_fake = out[b:]
    return mixup_real, mixup_fake


# ------------------------------ reference (jnp) ------------------------------


def my_dgi_reference(params,
                     user_h, item_h, fake_user_h, fake_item_h,
                     UV, VU, CUV, CVU, user_One, item_One):
    s_u = user_h.mean(0)
    s_i = item_h.mean(0)
    s_two = jax.nn.sigmoid(
        jnp.concatenate([s_u, s_i])[None, :] @ params["w_lin"] + params["b_lin"])

    def gat(adj, feat, w, b):
        return jnp.maximum((adj @ feat) @ w + b, 0.0)

    real_user = gat(UV, item_h, params["wg_u"], params["bg_u"])
    real_item = gat(VU, user_h, params["wg_i"], params["bg_i"])
    fake_user = gat(CUV, fake_item_h, params["wg_u"], params["bg_u"])
    fake_item = gat(CVU, fake_user_h, params["wg_i"], params["bg_i"])

    def sub(u, i):
        return jax.nn.sigmoid(
            jnp.concatenate([u, i], axis=1) @ params["w_sub"] + params["b_sub"])

    real_sub = sub(real_user[user_One], real_item[item_One])
    fake_sub = sub(fake_user[user_One], fake_item[item_One])
    return s_two * real_sub, s_two * fake_sub


# ---------------------------------- main -------------------------------------

if __name__ == "__main__":
    N_U, N_I, H, B = 16, 24, 32, 8   # n_users, n_items, hidden_dim, batch

    key = jax.random.PRNGKey(0)
    keys = jax.random.split(key, 12)

    def xavier(k, fan_in, fan_out, shape):
        bound = math.sqrt(6.0 / (fan_in + fan_out))
        return jax.random.uniform(k, shape, jnp.float32, -bound, bound)

    params = {
        # nn.Linear(2H, H): PyTorch weight [H, 2H] -> stored as [2H, H]
        "w_lin": xavier(keys[0], 2 * H, H, (2 * H, H)),
        "b_lin": jnp.zeros((1, H), jnp.float32),
        # nn.Linear(2H, H) for lin_sub
        "w_sub": xavier(keys[1], 2 * H, H, (2 * H, H)),
        "b_sub": jnp.zeros((1, H), jnp.float32),
        # GAT stand-in weights (shared between real/fake branches, like self.att)
        "wg_u": xavier(keys[2], H, H, (H, H)),
        "bg_u": jnp.zeros((1, H), jnp.float32),
        "wg_i": xavier(keys[3], H, H, (H, H)),
        "bg_i": jnp.zeros((1, H), jnp.float32),
    }

    user_hidden_out = jax.random.normal(keys[4], (N_U, H), jnp.float32)
    item_hidden_out = jax.random.normal(keys[5], (N_I, H), jnp.float32)
    fake_user_hidden_out = jax.random.normal(keys[6], (N_U, H), jnp.float32)
    fake_item_hidden_out = jax.random.normal(keys[7], (N_I, H), jnp.float32)

    # dense (row-normalized-ish) adjacency matrices
    UV_adj = (jax.random.uniform(keys[8], (N_U, N_I)) > 0.7).astype(jnp.float32) / N_I
    VU_adj = (jax.random.uniform(keys[9], (N_I, N_U)) > 0.7).astype(jnp.float32) / N_U
    CUV_adj = (jax.random.uniform(keys[10], (N_U, N_I)) > 0.7).astype(jnp.float32) / N_I
    CVU_adj = (jax.random.uniform(keys[11], (N_I, N_U)) > 0.7).astype(jnp.float32) / N_U

    user_One = jax.random.randint(jax.random.PRNGKey(1), (B,), 0, N_U, jnp.int32)
    item_One = jax.random.randint(jax.random.PRNGKey(2), (B,), 0, N_I, jnp.int32)

    mixup_real, mixup_fake = my_dgi_forward(
        params, user_hidden_out, item_hidden_out,
        fake_user_hidden_out, fake_item_hidden_out,
        UV_adj, VU_adj, CUV_adj, CVU_adj, user_One, item_One)
    jax.block_until_ready((mixup_real, mixup_fake))

    ref_real, ref_fake = my_dgi_reference(
        params, user_hidden_out, item_hidden_out,
        fake_user_hidden_out, fake_item_hidden_out,
        UV_adj, VU_adj, CUV_adj, CVU_adj, user_One, item_One)

    assert mixup_real.shape == (B, H) and mixup_fake.shape == (B, H)
    assert jnp.allclose(mixup_real, ref_real, atol=1e-5, rtol=1e-5)
    assert jnp.allclose(mixup_fake, ref_fake, atol=1e-5, rtol=1e-5)

    print("KERNEL_OK")
</pallas_src>

<mosaic_0001>
module attributes {stable_mosaic.version = 11 : i64} {
  func.func @fused_dgi_kernel(%arg0: memref<8x1xi32, #tpu.memory_space<vmem>>, %arg1: memref<8x1xi32, #tpu.memory_space<vmem>>, %arg2: memref<16x32xf32, #tpu.memory_space<vmem>>, %arg3: memref<24x32xf32, #tpu.memory_space<vmem>>, %arg4: memref<16x32xf32, #tpu.memory_space<vmem>>, %arg5: memref<24x32xf32, #tpu.memory_space<vmem>>, %arg6: memref<16x24xf32, #tpu.memory_space<vmem>>, %arg7: memref<24x16xf32, #tpu.memory_space<vmem>>, %arg8: memref<16x24xf32, #tpu.memory_space<vmem>>, %arg9: memref<24x16xf32, #tpu.memory_space<vmem>>, %arg10: memref<64x32xf32, #tpu.memory_space<vmem>>, %arg11: memref<1x32xf32, #tpu.memory_space<vmem>>, %arg12: memref<64x32xf32, #tpu.memory_space<vmem>>, %arg13: memref<1x32xf32, #tpu.memory_space<vmem>>, %arg14: memref<32x32xf32, #tpu.memory_space<vmem>>, %arg15: memref<1x32xf32, #tpu.memory_space<vmem>>, %arg16: memref<32x32xf32, #tpu.memory_space<vmem>>, %arg17: memref<1x32xf32, #tpu.memory_space<vmem>>, %arg18: memref<16x32xf32, #tpu.memory_space<vmem>>) attributes {dimension_semantics = [], scalar_prefetch = 0 : i64, scratch_operands = 0 : i64, tpu.core_type = #tpu.core_type<tc>} {
    %c0 = arith.constant 0 : index
    %c0_0 = arith.constant 0 : index
    %0 = vector.load %arg2[%c0, %c0_0] : memref<16x32xf32, #tpu.memory_space<vmem>>, vector<16x32xf32>
    %cst = arith.constant dense<0.000000e+00> : vector<32xf32>
    %1 = vector.multi_reduction <add>, %0, %cst [0] : vector<16x32xf32> to vector<32xf32>
    %2 = vector.shape_cast %1 : vector<32xf32> to vector<1x32xf32>
    %cst_1 = arith.constant 1.600000e+01 : f32
    %3 = vector.broadcast %cst_1 : f32 to vector<1x32xf32>
    %4 = arith.divf %2, %3 : vector<1x32xf32>
    %c0_2 = arith.constant 0 : index
    %c0_3 = arith.constant 0 : index
    %5 = vector.load %arg3[%c0_2, %c0_3] : memref<24x32xf32, #tpu.memory_space<vmem>>, vector<24x32xf32>
    %cst_4 = arith.constant dense<0.000000e+00> : vector<32xf32>
    %6 = vector.multi_reduction <add>, %5, %cst_4 [0] : vector<24x32xf32> to vector<32xf32>
    %7 = vector.shape_cast %6 : vector<32xf32> to vector<1x32xf32>
    %cst_5 = arith.constant 2.400000e+01 : f32
    %8 = vector.broadcast %cst_5 : f32 to vector<1x32xf32>
    %9 = arith.divf %7, %8 : vector<1x32xf32>
    %10 = tpu.concatenate %4, %9 in 1 : vector<1x32xf32>, vector<1x32xf32> -> vector<1x64xf32>
    %c0_6 = arith.constant 0 : index
    %c0_7 = arith.constant 0 : index
    %11 = vector.load %arg10[%c0_6, %c0_7] : memref<64x32xf32, #tpu.memory_space<vmem>>, vector<64x32xf32>
    %cst_8 = arith.constant dense<0.000000e+00> : vector<1x32xf32>
    %12 = tpu.matmul %10, %11, %cst_8 {dimension_numbers = #tpu.dot_dimension_numbers<[1], [0], [0], [1], [0, 0, 1, 1], [], []>} : vector<1x64xf32>, vector<64x32xf32>, vector<1x32xf32> -> vector<1x32xf32>
    %c0_9 = arith.constant 0 : index
    %c0_10 = arith.constant 0 : index
    %13 = vector.load %arg11[%c0_9, %c0_10] : memref<1x32xf32, #tpu.memory_space<vmem>>, vector<1x32xf32>
    %14 = arith.addf %12, %13 : vector<1x32xf32>
    %15 = arith.negf %14 : vector<1x32xf32>
    %16 = math.exp %15 : vector<1x32xf32>
    %cst_11 = arith.constant 1.000000e+00 : f32
    %17 = vector.broadcast %cst_11 : f32 to vector<1x32xf32>
    %18 = arith.addf %17, %16 : vector<1x32xf32>
    %19 = arith.divf %17, %18 : vector<1x32xf32>
    %20 = tpu.iota {dimensions = array<i32: 1>} : vector<8x16xi32>
    %21 = tpu.iota {dimensions = array<i32: 1>} : vector<8x24xi32>
    %c0_12 = arith.constant 0 : index
    %c0_13 = arith.constant 0 : index
    %22 = vector.load %arg0[%c0_12, %c0_13] : memref<8x1xi32, #tpu.memory_space<vmem>>, vector<8x1xi32>
    %23 = vector.broadcast %22 : vector<8x1xi32> to vector<8x16xi32>
    %24 = arith.cmpi eq, %23, %20 : vector<8x16xi32>
    %25 = arith.extui %24 : vector<8x16xi1> to vector<8x16xi32>
    %26 = arith.sitofp %25 : vector<8x16xi32> to vector<8x16xf32>
    %c0_14 = arith.constant 0 : index
    %c0_15 = arith.constant 0 : index
    %27 = vector.load %arg1[%c0_14, %c0_15] : memref<8x1xi32, #tpu.memory_space<vmem>>, vector<8x1xi32>
    %28 = vector.broadcast %27 : vector<8x1xi32> to vector<8x24xi32>
    %29 = arith.cmpi eq, %28, %21 : vector<8x24xi32>
    %30 = arith.extui %29 : vector<8x24xi1> to vector<8x24xi32>
    %31 = arith.sitofp %30 : vector<8x24xi32> to vector<8x24xf32>
    %c0_16 = arith.constant 0 : index
    %c0_17 = arith.constant 0 : index
    %32 = vector.load %arg6[%c0_16, %c0_17] : memref<16x24xf32, #tpu.memory_space<vmem>>, vector<16x24xf32>
    %cst_18 = arith.constant dense<0.000000e+00> : vector<8x24xf32>
    %33 = tpu.matmul %26, %32, %cst_18 {dimension_numbers = #tpu.dot_dimension_numbers<[1], [0], [0], [1], [0, 0, 1, 1], [], []>} : vector<8x16xf32>, vector<16x24xf32>, vector<8x24xf32> -> vector<8x24xf32>
    %c0_19 = arith.constant 0 : index
    %c0_20 = arith.constant 0 : index
    %34 = vector.load %arg8[%c0_19, %c0_20] : memref<16x24xf32, #tpu.memory_space<vmem>>, vector<16x24xf32>
    %cst_21 = arith.constant dense<0.000000e+00> : vector<8x24xf32>
    %35 = tpu.matmul %26, %34, %cst_21 {dimension_numbers = #tpu.dot_dimension_numbers<[1], [0], [0], [1], [0, 0, 1, 1], [], []>} : vector<8x16xf32>, vector<16x24xf32>, vector<8x24xf32> -> vector<8x24xf32>
    %c0_22 = arith.constant 0 : index
    %c0_23 = arith.constant 0 : index
    %36 = vector.load %arg7[%c0_22, %c0_23] : memref<24x16xf32, #tpu.memory_space<vmem>>, vector<24x16xf32>
    %cst_24 = arith.constant dense<0.000000e+00> : vector<8x16xf32>
    %37 = tpu.matmul %31, %36, %cst_24 {dimension_numbers = #tpu.dot_dimension_numbers<[1], [0], [0], [1], [0, 0, 1, 1], [], []>} : vector<8x24xf32>, vector<24x16xf32>, vector<8x16xf32> -> vector<8x16xf32>
    %c0_25 = arith.constant 0 : index
    %c0_26 = arith.constant 0 : index
    %38 = vector.load %arg9[%c0_25, %c0_26] : memref<24x16xf32, #tpu.memory_space<vmem>>, vector<24x16xf32>
    %cst_27 = arith.constant dense<0.000000e+00> : vector<8x16xf32>
    %39 = tpu.matmul %31, %38, %cst_27 {dimension_numbers = #tpu.dot_dimension_numbers<[1], [0], [0], [1], [0, 0, 1, 1], [], []>} : vector<8x24xf32>, vector<24x16xf32>, vector<8x16xf32> -> vector<8x16xf32>
    %c0_28 = arith.constant 0 : index
    %c0_29 = arith.constant 0 : index
    %40 = vector.load %arg3[%c0_28, %c0_29] : memref<24x32xf32, #tpu.memory_space<vmem>>, vector<24x32xf32>
    %cst_30 = arith.constant dense<0.000000e+00> : vector<8x32xf32>
    %41 = tpu.matmul %33, %40, %cst_30 {dimension_numbers = #tpu.dot_dimension_numbers<[1], [0], [0], [1], [0, 0, 1, 1], [], []>} : vector<8x24xf32>, vector<24x32xf32>, vector<8x32xf32> -> vector<8x32xf32>
    %c0_31 = arith.constant 0 : index
    %c0_32 = arith.constant 0 : index
    %42 = vector.load %arg5[%c0_31, %c0_32] : memref<24x32xf32, #tpu.memory_space<vmem>>, vector<24x32xf32>
    %cst_33 = arith.constant dense<0.000000e+00> : vector<8x32xf32>
    %43 = tpu.matmul %35, %42, %cst_33 {dimension_numbers = #tpu.dot_dimension_numbers<[1], [0], [0], [1], [0, 0, 1, 1], [], []>} : vector<8x24xf32>, vector<24x32xf32>, vector<8x32xf32> -> vector<8x32xf32>
    %44 = tpu.concatenate %41, %43 in 0 : vector<8x32xf32>, vector<8x32xf32> -> vector<16x32xf32>
    %c0_34 = arith.constant 0 : index
    %c0_35 = arith.constant 0 : index
    %45 = vector.load %arg2[%c0_34, %c0_35] : memref<16x32xf32, #tpu.memory_space<vmem>>, vector<16x32xf32>
    %cst_36 = arith.constant dense<0.000000e+00> : vector<8x32xf32>
    %46 = tpu.matmul %37, %45, %cst_36 {dimension_numbers = #tpu.dot_dimension_numbers<[1], [0], [0], [1], [0, 0, 1, 1], [], []>} : vector<8x16xf32>, vector<16x32xf32>, vector<8x32xf32> -> vector<8x32xf32>
    %c0_37 = arith.constant 0 : index
    %c0_38 = arith.constant 0 : index
    %47 = vector.load %arg4[%c0_37, %c0_38] : memref<16x32xf32, #tpu.memory_space<vmem>>, vector<16x32xf32>
    %cst_39 = arith.constant dense<0.000000e+00> : vector<8x32xf32>
    %48 = tpu.matmul %39, %47, %cst_39 {dimension_numbers = #tpu.dot_dimension_numbers<[1], [0], [0], [1], [0, 0, 1, 1], [], []>} : vector<8x16xf32>, vector<16x32xf32>, vector<8x32xf32> -> vector<8x32xf32>
    %49 = tpu.concatenate %46, %48 in 0 : vector<8x32xf32>, vector<8x32xf32> -> vector<16x32xf32>
    %c0_40 = arith.constant 0 : index
    %c0_41 = arith.constant 0 : index
    %50 = vector.load %arg14[%c0_40, %c0_41] : memref<32x32xf32, #tpu.memory_space<vmem>>, vector<32x32xf32>
    %cst_42 = arith.constant dense<0.000000e+00> : vector<16x32xf32>
    %51 = tpu.matmul %44, %50, %cst_42 {dimension_numbers = #tpu.dot_dimension_numbers<[1], [0], [0], [1], [0, 0, 1, 1], [], []>} : vector<16x32xf32>, vector<32x32xf32>, vector<16x32xf32> -> vector<16x32xf32>
    %c0_43 = arith.constant 0 : index
    %c0_44 = arith.constant 0 : index
    %52 = vector.load %arg15[%c0_43, %c0_44] : memref<1x32xf32, #tpu.memory_space<vmem>>, vector<1x32xf32>
    %53 = vector.broadcast %52 : vector<1x32xf32> to vector<16x32xf32>
    %54 = arith.addf %51, %53 : vector<16x32xf32>
    %cst_45 = arith.constant 0.000000e+00 : f32
    %55 = vector.broadcast %cst_45 : f32 to vector<16x32xf32>
    %56 = arith.maximumf %54, %55 : vector<16x32xf32>
    %c0_46 = arith.constant 0 : index
    %c0_47 = arith.constant 0 : index
    %57 = vector.load %arg16[%c0_46, %c0_47] : memref<32x32xf32, #tpu.memory_space<vmem>>, vector<32x32xf32>
    %cst_48 = arith.constant dense<0.000000e+00> : vector<16x32xf32>
    %58 = tpu.matmul %49, %57, %cst_48 {dimension_numbers = #tpu.dot_dimension_numbers<[1], [0], [0], [1], [0, 0, 1, 1], [], []>} : vector<16x32xf32>, vector<32x32xf32>, vector<16x32xf32> -> vector<16x32xf32>
    %c0_49 = arith.constant 0 : index
    %c0_50 = arith.constant 0 : index
    %59 = vector.load %arg17[%c0_49, %c0_50] : memref<1x32xf32, #tpu.memory_space<vmem>>, vector<1x32xf32>
    %60 = vector.broadcast %59 : vector<1x32xf32> to vector<16x32xf32>
    %61 = arith.addf %58, %60 : vector<16x32xf32>
    %cst_51 = arith.constant 0.000000e+00 : f32
    %62 = vector.broadcast %cst_51 : f32 to vector<16x32xf32>
    %63 = arith.maximumf %61, %62 : vector<16x32xf32>
    %64 = tpu.concatenate %56, %63 in 1 : vector<16x32xf32>, vector<16x32xf32> -> vector<16x64xf32>
    %c0_52 = arith.constant 0 : index
    %c0_53 = arith.constant 0 : index
    %65 = vector.load %arg12[%c0_52, %c0_53] : memref<64x32xf32, #tpu.memory_space<vmem>>, vector<64x32xf32>
    %cst_54 = arith.constant dense<0.000000e+00> : vector<16x32xf32>
    %66 = tpu.matmul %64, %65, %cst_54 {dimension_numbers = #tpu.dot_dimension_numbers<[1], [0], [0], [1], [0, 0, 1, 1], [], []>} : vector<16x64xf32>, vector<64x32xf32>, vector<16x32xf32> -> vector<16x32xf32>
    %c0_55 = arith.constant 0 : index
    %c0_56 = arith.constant 0 : index
    %67 = vector.load %arg13[%c0_55, %c0_56] : memref<1x32xf32, #tpu.memory_space<vmem>>, vector<1x32xf32>
    %68 = vector.broadcast %67 : vector<1x32xf32> to vector<16x32xf32>
    %69 = arith.addf %66, %68 : vector<16x32xf32>
    %70 = vector.shape_cast %19 : vector<1x32xf32> to vector<1x32xf32>
    %71 = vector.broadcast %70 : vector<1x32xf32> to vector<16x32xf32>
    %72 = arith.negf %69 : vector<16x32xf32>
    %73 = math.exp %72 : vector<16x32xf32>
    %cst_57 = arith.constant 1.000000e+00 : f32
    %74 = vector.broadcast %cst_57 : f32 to vector<16x32xf32>
    %75 = arith.addf %74, %73 : vector<16x32xf32>
    %76 = arith.divf %74, %75 : vector<16x32xf32>
    %77 = arith.mulf %71, %76 : vector<16x32xf32>
    %c0_58 = arith.constant 0 : index
    %c0_59 = arith.constant 0 : index
    %78 = vector.load %arg18[%c0_58, %c0_59] : memref<16x32xf32, #tpu.memory_space<vmem>>, vector<16x32xf32>
    tpu.vector_store %arg18[%c0_58, %c0_59], %77 {strides = array<i32>} : memref<16x32xf32, #tpu.memory_space<vmem>>, vector<16x32xf32>,
    return
  }
}

</mosaic_0001>

<llo_original>
// kernel: tpu_custom_call.1
$region0: #{tpu_custom_call.1}
  #allocation0 [shape = 'u32[]', space=smem, size = 0x4, offset = 0x4, fixed_abs, tag = 'smem constant byte address 0x4 - core index']
  #allocation1 [shape = 'u32[72,128]{1,0:T(1,128)}', space=vmem, size = 0x9000, scoped, tag = 'internal scratch']
  %s0 = inlined_call_operand.vmem [shape: s32[8,1], index: 0, kind: input, shape index: {}]
  %s1 = inlined_call_operand.vmem [shape: s32[8,1], index: 1, kind: input, shape index: {}]
  %s2 = inlined_call_operand.vmem [shape: f32[16,32], index: 2, kind: input, shape index: {}]
  %s3 = inlined_call_operand.vmem [shape: f32[24,32], index: 3, kind: input, shape index: {}]
  %s4 = inlined_call_operand.vmem [shape: f32[16,32], index: 4, kind: input, shape index: {}]
  %s5 = inlined_call_operand.vmem [shape: f32[24,32], index: 5, kind: input, shape index: {}]
  %s6 = inlined_call_operand.vmem [shape: f32[16,24], index: 6, kind: input, shape index: {}]
  %s7 = inlined_call_operand.vmem [shape: f32[24,16], index: 7, kind: input, shape index: {}]
  %s8 = inlined_call_operand.vmem [shape: f32[16,24], index: 8, kind: input, shape index: {}]
  %s9 = inlined_call_operand.vmem [shape: f32[24,16], index: 9, kind: input, shape index: {}]
  %s10 = inlined_call_operand.vmem [shape: f32[64,32], index: 10, kind: input, shape index: {}]
  %s11 = inlined_call_operand.vmem [shape: f32[1,32], index: 11, kind: input, shape index: {}]
  %s12 = inlined_call_operand.vmem [shape: f32[64,32], index: 12, kind: input, shape index: {}]
  %s13 = inlined_call_operand.vmem [shape: f32[1,32], index: 13, kind: input, shape index: {}]
  %s14 = inlined_call_operand.vmem [shape: f32[32,32], index: 14, kind: input, shape index: {}]
  %s15 = inlined_call_operand.vmem [shape: f32[1,32], index: 15, kind: input, shape index: {}]
  %s16 = inlined_call_operand.vmem [shape: f32[32,32], index: 16, kind: input, shape index: {}]
  %s17 = inlined_call_operand.vmem [shape: f32[1,32], index: 17, kind: input, shape index: {}]
  %s18 = inlined_call_operand.hbm [shape: f32[16,32], index: 18, kind: output, shape index: {}]
  %s19 = sld [smem:[#allocation0]]
  $region82: #{tpu_custom_call.1} parent=0
    _
  %s21 = ssub.s32 1, %s19
  %s22 = scalar_select 0, %s21, %s19
  $region1: #{tpu_custom_call.1} parent=0
    #allocation2 [shape = 'u8[8192]{0}', space=vmem, size = 0x2000, scoped, tag = 'output window, operand 0, single buffered']
    #allocation3 [shape = 's32[1]{0}', space=sflag, size = 0x4, scoped, tag = 'scoped memory for tpu_custom_call.1']
    %23 = vsyncpa [#allocation3], 0
    // Predicated region
    $region2: #{tpu_custom_call.1} parent=1 // pred_check
      _
    $region3: #{tpu_custom_call.1} parent=1 // pred_check_branch
      %25 = sbr.rel (0) target = $region5
    $region4: #{tpu_custom_call.1} parent=1 // pred_region
      _
    $region5: #{tpu_custom_call.1} parent=1 // pred_fallthru
      _
    // Predicated region
    $region6: #{tpu_custom_call.1} parent=1 // pred_check
      _
    $region7: #{tpu_custom_call.1} parent=1 // pred_check_branch
      %27 = sbr.rel (0) target = $region9
    $region8: #{tpu_custom_call.1} parent=1 // pred_region
      _
    $region9: #{tpu_custom_call.1} parent=1 // pred_fallthru
      _
    // Predicated region
    $region10: #{tpu_custom_call.1} parent=1 // pred_check
      _
    $region11: #{tpu_custom_call.1} parent=1 // pred_check_branch
      %29 = sbr.rel (0) target = $region13
    $region12: #{tpu_custom_call.1} parent=1 // pred_region
      _
    $region13: #{tpu_custom_call.1} parent=1 // pred_fallthru
      _
    // Predicated region
    $region14: #{tpu_custom_call.1} parent=1 // pred_check
      _
    $region15: #{tpu_custom_call.1} parent=1 // pred_check_branch
      %31 = sbr.rel (0) target = $region17
    $region16: #{tpu_custom_call.1} parent=1 // pred_region
      _
    $region17: #{tpu_custom_call.1} parent=1 // pred_fallthru
      _
    // Predicated region
    $region18: #{tpu_custom_call.1} parent=1 // pred_check
      _
    $region19: #{tpu_custom_call.1} parent=1 // pred_check_branch
      %33 = sbr.rel (0) target = $region21
    $region20: #{tpu_custom_call.1} parent=1 // pred_region
      _
    $region21: #{tpu_custom_call.1} parent=1 // pred_fallthru
      _
    // Predicated region
    $region22: #{tpu_custom_call.1} parent=1 // pred_check
      _
    $region23: #{tpu_custom_call.1} parent=1 // pred_check_branch
      %35 = sbr.rel (0) target = $region25
    $region24: #{tpu_custom_call.1} parent=1 // pred_region
      _
    $region25: #{tpu_custom_call.1} parent=1 // pred_fallthru
      _
    // Predicated region
    $region26: #{tpu_custom_call.1} parent=1 // pred_check
      _
    $region27: #{tpu_custom_call.1} parent=1 // pred_check_branch
      %37 = sbr.rel (0) target = $region29
    $region28: #{tpu_custom_call.1} parent=1 // pred_region
      _
    $region29: #{tpu_custom_call.1} parent=1 // pred_fallthru
      _
    // Predicated region
    $region30: #{tpu_custom_call.1} parent=1 // pred_check
      _
    $region31: #{tpu_custom_call.1} parent=1 // pred_check_branch
      %39 = sbr.rel (0) target = $region33
    $region32: #{tpu_custom_call.1} parent=1 // pred_region
      _
    $region33: #{tpu_custom_call.1} parent=1 // pred_fallthru
      _
    // Predicated region
    $region34: #{tpu_custom_call.1} parent=1 // pred_check
      _
    $region35: #{tpu_custom_call.1} parent=1 // pred_check_branch
      %41 = sbr.rel (0) target = $region37
    $region36: #{tpu_custom_call.1} parent=1 // pred_region
      _
    $region37: #{tpu_custom_call.1} parent=1 // pred_fallthru
      _
    // Predicated region
    $region38: #{tpu_custom_call.1} parent=1 // pred_check
      _
    $region39: #{tpu_custom_call.1} parent=1 // pred_check_branch
      %43 = sbr.rel (0) target = $region41
    $region40: #{tpu_custom_call.1} parent=1 // pred_region
      _
    $region41: #{tpu_custom_call.1} parent=1 // pred_fallthru
      _
    // Predicated region
    $region42: #{tpu_custom_call.1} parent=1 // pred_check
      _
    $region43: #{tpu_custom_call.1} parent=1 // pred_check_branch
      %45 = sbr.rel (0) target = $region45
    $region44: #{tpu_custom_call.1} parent=1 // pred_region
      _
    $region45: #{tpu_custom_call.1} parent=1 // pred_fallthru
      _
    // Predicated region
    $region46: #{tpu_custom_call.1} parent=1 // pred_check
      _
    $region47: #{tpu_custom_call.1} parent=1 // pred_check_branch
      %47 = sbr.rel (0) target = $region49
    $region48: #{tpu_custom_call.1} parent=1 // pred_region
      _
    $region49: #{tpu_custom_call.1} parent=1 // pred_fallthru
      _
    // Predicated region
    $region50: #{tpu_custom_call.1} parent=1 // pred_check
      _
    $region51: #{tpu_custom_call.1} parent=1 // pred_check_branch
      %49 = sbr.rel (0) target = $region53
    $region52: #{tpu_custom_call.1} parent=1 // pred_region
      _
    $region53: #{tpu_custom_call.1} parent=1 // pred_fallthru
      _
    // Predicated region
    $region54: #{tpu_custom_call.1} parent=1 // pred_check
      _
    $region55: #{tpu_custom_call.1} parent=1 // pred_check_branch
      %51 = sbr.rel (0) target = $region57
    $region56: #{tpu_custom_call.1} parent=1 // pred_region
      _
    $region57: #{tpu_custom_call.1} parent=1 // pred_fallthru
      _
    // Predicated region
    $region58: #{tpu_custom_call.1} parent=1 // pred_check
      _
    $region59: #{tpu_custom_call.1} parent=1 // pred_check_branch
      %53 = sbr.rel (0) target = $region61
    $region60: #{tpu_custom_call.1} parent=1 // pred_region
      _
    $region61: #{tpu_custom_call.1} parent=1 // pred_fallthru
      _
    // Predicated region
    $region62: #{tpu_custom_call.1} parent=1 // pred_check
      _
    $region63: #{tpu_custom_call.1} parent=1 // pred_check_branch
      %55 = sbr.rel (0) target = $region65
    $region64: #{tpu_custom_call.1} parent=1 // pred_region
      _
    $region65: #{tpu_custom_call.1} parent=1 // pred_fallthru
      _
    // Predicated region
    $region66: #{tpu_custom_call.1} parent=1 // pred_check
      _
    $region67: #{tpu_custom_call.1} parent=1 // pred_check_branch
      %57 = sbr.rel (0) target = $region69
    $region68: #{tpu_custom_call.1} parent=1 // pred_region
      _
    $region69: #{tpu_custom_call.1} parent=1 // pred_fallthru
      _
    // Predicated region
    $region70: #{tpu_custom_call.1} parent=1 // pred_check
      _
    $region71: #{tpu_custom_call.1} parent=1 // pred_check_branch
      %59 = sbr.rel (0) target = $region73
    $region72: #{tpu_custom_call.1} parent=1 // pred_region
      _
    $region73: #{tpu_custom_call.1} parent=1 // pred_fallthru
      _
    %v60 = vld [vmem:[%s2] sm:$0xff]
    %v61 = vld [vmem:[%s2 + $0x8] sm:$0xff]
    %vm62 = vcmask 261120
    %v63 = vsel %vm62, %v60, 0.0
    %v64 = vsel %vm62, %v61, 0.0
    %v65 = vadd.f32 %v63, %v64
    %v66 = vrot.slane %v65, 4
    %v67 = vadd.f32 %v65, %v66
    %v68 = vrot.slane %v67, 2
    %v69 = vadd.f32 %v67, %v68
    %v70 = vrot.slane %v69, 1
    %v71 = vadd.f32 %v69, %v70
    %v72 = vrcp.pop 16.0
    %v73 = vmul.f32 16.0, %v72
    %v74 = vsub.f32 1.0, %v73
    %v75 = vmul.f32 %v72, %v74
    %v76 = vadd.f32 %v72, %v75
    %vm77 = vweird.f32 %v72
    %v78 = vsel %vm77, %v72, %v76
    %v79 = vmul.f32 %v71, %v78
    %v80 = vld [vmem:[%s3] sm:$0xff]
    %v81 = vld [vmem:[%s3 + $0x8] sm:$0xff]
    %v82 = vld [vmem:[%s3 + $0x10] sm:$0xff]
    %v83 = vsel %vm62, %v80, 0.0
    %v84 = vsel %vm62, %v81, 0.0
    %v85 = vadd.f32 %v83, %v84
    %v86 = vsel %vm62, %v82, 0.0
    %v87 = vadd.f32 %v85, %v86
    %v88 = vrot.slane %v87, 4
    %v89 = vadd.f32 %v87, %v88
    %v90 = vrot.slane %v89, 2
    %v91 = vadd.f32 %v89, %v90
    %v92 = vrot.slane %v91, 1
    %v93 = vadd.f32 %v91, %v92
    %v94 = vrcp.pop 24.0
    %v95 = vmul.f32 24.0, %v94
    %v96 = vsub.f32 1.0, %v95
    %v97 = vmul.f32 %v94, %v96
    %v98 = vadd.f32 %v94, %v97
    %vm99 = vweird.f32 %v94
    %v100 = vsel %vm99, %v94, %v98
    %v101 = vmul.f32 %v93, %v100
    %103 = vrot.lane.b32.xlu0 %v101, 32
    %v104 = vpop.permute.xlu0 %103
    %v106 = vsel %vm62, %v79, %v104
    %v107 = vld [vmem:[%s10] sm:$0xff]
    %v108 = vld [vmem:[%s10 + $0x8] sm:$0xff]
    %v109 = vld [vmem:[%s10 + $0x10] sm:$0xff]
    %v110 = vld [vmem:[%s10 + $0x18] sm:$0xff]
    %v111 = vld [vmem:[%s10 + $0x20] sm:$0xff]
    %v112 = vld [vmem:[%s10 + $0x28] sm:$0xff]
    %v113 = vld [vmem:[%s10 + $0x30] sm:$0xff]
    %v114 = vld [vmem:[%s10 + $0x38] sm:$0xff]
    %v115 = vld [vmem:[%s11] sm:$0x1]
    %vm116 = vcmask 523264
    %v118 = vsel %vm116, %v106, 0
    %120 = vmatpush.msra.mxu0 0.0
    %121 = vmatpush.msra.mxu0 0.0
    %122 = vmatpush.msra.mxu0 0.0
    %123 = vmatpush.msra.mxu0 0.0
    %124 = vmatpush.msra.mxu0 0.0
    %125 = vmatpush.msra.mxu0 0.0
    %126 = vmatpush.msra.mxu0 0.0
    %127 = vmatpush.msra.mxu0 0.0
    %128 = vmatpush.msra.mxu0 %v114
    %129 = vmatpush.msra.mxu0 %v113
    %130 = vmatpush.msra.mxu0 %v112
    %131 = vmatpush.msra.mxu0 %v111
    %132 = vmatpush.msra.mxu0 %v110
    %133 = vmatpush.msra.mxu0 %v109
    %134 = vmatpush.msra.mxu0 %v108
    %135 = vmatpush.msra.mxu0 %v107
    %136 = vmatmul.f32.gmra.mxu0 %v118
    %v137 = vpop.f32.mrf.mxu0
    %v138 = vadd.f32 %v115, %v137
    %139 = vdwg.mxu0
    %v140 = vxor.u32 %v138, 2147483648
    %v141 = vmul.f32 %v140, 1.442695
    %v142 = vpow.pop %v141
    %v143 = vadd.f32 %v142, 1.0
    %v144 = vrcp.pop %v143
    %v145 = vmul.f32 %v143, %v144
    %v146 = vsub.f32 1.0, %v145
    %v147 = vmul.f32 %v144, %v146
    %v148 = vadd.f32 %v144, %v147
    %vm149 = vweird.f32 %v143
    %vm150 = vweird.f32 %v144
    %vm151 = vmor %vm149, %vm150
    %v152 = vsel %vm151, %v144, %v148
    %v153 = vand.u32 2147483647, %v143
    %vm154 = vcmp.eq.f32.partialorder %v153, 8.507059e+37
    %v155 = vand.u32 %v143, 2147483648
    %v156 = vor.u32 1.1754944e-38, %v155
    %v157 = vsel %vm154, %v156, %v152
    %v158 = vmul.f32 1.0, %v157
    %v159 = vlaneseq
    %v160 = vand.u32 %v159, 127
    %v161 = vld [vmem:[%s0] sm:$0xff]
    %162 = vset.pattern.permute.xlu0 0
    %163 = vperm.xlu0 %162, %v161
    %v164 = vpop.permute.xlu0 %163
    %vm165 = vcmp.eq.s32.totalorder %v164, %v160
    %v166 = vsel %vm165, 1, 0
    %v167 = vcvt.s32.f32 %v166
    %v168 = vld [vmem:[%s1] sm:$0xff]
    %169 = vset.pattern.permute.xlu0 0
    %170 = vperm.xlu0 %169, %v168
    %v171 = vpop.permute.xlu0 %170
    %vm172 = vcmp.eq.s32.totalorder %v171, %v160
    %v173 = vsel %vm172, 1, 0
    %v174 = vcvt.s32.f32 %v173
    %v175 = vld [vmem:[%s6] sm:$0xff]
    %v176 = vld [vmem:[%s6 + $0x8] sm:$0xff]
    %vm177 = vcmask 130048
    %v179 = vsel %vm177, %v167, 0
    %181 = vmatpush.msra.mxu0 0.0
    %182 = vmatpush.msra.mxu0 0.0
    %183 = vmatpush.msra.mxu0 0.0
    %184 = vmatpush.msra.mxu0 0.0
    %185 = vmatpush.msra.mxu0 0.0
    %186 = vmatpush.msra.mxu0 0.0
    %187 = vmatpush.msra.mxu0 0.0
    %188 = vmatpush.msra.mxu0 0.0
    %189 = vmatpush.msra.mxu0 0.0
    %190 = vmatpush.msra.mxu0 0.0
    %191 = vmatpush.msra.mxu0 0.0
    %192 = vmatpush.msra.mxu0 0.0
    %193 = vmatpush.msra.mxu0 0.0
    %194 = vmatpush.msra.mxu0 0.0
    %195 = vmatpush.msra.mxu0 %v176
    %196 = vmatpush.msra.mxu0 %v175
    %197 = vmatmul.f32.gmra.mxu0 %v179
    %v198 = vpop.f32.mrf.mxu0
    %v199 = vadd.f32 0.0, %v198
    %200 = vdwg.mxu0
    %v201 = vld [vmem:[%s8] sm:$0xff]
    %v202 = vld [vmem:[%s8 + $0x8] sm:$0xff]
    %203 = vmatpush.msra.mxu0 0.0
    %204 = vmatpush.msra.mxu0 0.0
    %205 = vmatpush.msra.mxu0 0.0
    %206 = vmatpush.msra.mxu0 0.0
    %207 = vmatpush.msra.mxu0 0.0
    %208 = vmatpush.msra.mxu0 0.0
    %209 = vmatpush.msra.mxu0 0.0
    %210 = vmatpush.msra.mxu0 0.0
    %211 = vmatpush.msra.mxu0 0.0
    %212 = vmatpush.msra.mxu0 0.0
    %213 = vmatpush.msra.mxu0 0.0
    %214 = vmatpush.msra.mxu0 0.0
    %215 = vmatpush.msra.mxu0 0.0
    %216 = vmatpush.msra.mxu0 0.0
    %217 = vmatpush.msra.mxu0 %v202
    %218 = vmatpush.msra.mxu0 %v201
    %219 = vmatmul.f32.gmra.mxu0 %v179
    %v220 = vpop.f32.mrf.mxu0
    %v221 = vadd.f32 0.0, %v220
    %222 = vdwg.mxu0
    %v223 = vld [vmem:[%s7] sm:$0xff]
    %v224 = vld [vmem:[%s7 + $0x8] sm:$0xff]
    %v225 = vld [vmem:[%s7 + $0x10] sm:$0xff]
    %vm226 = vcmask 195584
    %v228 = vsel %vm226, %v174, 0
    %230 = vmatpush.msra.mxu0 0.0
    %231 = vmatpush.msra.mxu0 0.0
    %232 = vmatpush.msra.mxu0 0.0
    %233 = vmatpush.msra.mxu0 0.0
    %234 = vmatpush.msra.mxu0 0.0
    %235 = vmatpush.msra.mxu0 0.0
    %236 = vmatpush.msra.mxu0 0.0
    %237 = vmatpush.msra.mxu0 0.0
    %238 = vmatpush.msra.mxu0 0.0
    %239 = vmatpush.msra.mxu0 0.0
    %240 = vmatpush.msra.mxu0 0.0
    %241 = vmatpush.msra.mxu0 0.0
    %242 = vmatpush.msra.mxu0 0.0
    %243 = vmatpush.msra.mxu0 %v225
    %244 = vmatpush.msra.mxu0 %v224
    %245 = vmatpush.msra.mxu0 %v223
    %246 = vmatmul.f32.gmra.mxu0 %v228
    %v247 = vpop.f32.mrf.mxu0
    %v248 = vadd.f32 0.0, %v247
    %249 = vdwg.mxu0
    %v250 = vld [vmem:[%s9] sm:$0xff]
    %v251 = vld [vmem:[%s9 + $0x8] sm:$0xff]
    %v252 = vld [vmem:[%s9 + $0x10] sm:$0xff]
    %253 = vmatpush.msra.mxu0 0.0
    %254 = vmatpush.msra.mxu0 0.0
    %255 = vmatpush.msra.mxu0 0.0
    %256 = vmatpush.msra.mxu0 0.0
    %257 = vmatpush.msra.mxu0 0.0
    %258 = vmatpush.msra.mxu0 0.0
    %259 = vmatpush.msra.mxu0 0.0
    %260 = vmatpush.msra.mxu0 0.0
    %261 = vmatpush.msra.mxu0 0.0
    %262 = vmatpush.msra.mxu0 0.0
    %263 = vmatpush.msra.mxu0 0.0
    %264 = vmatpush.msra.mxu0 0.0
    %265 = vmatpush.msra.mxu0 0.0
    %266 = vmatpush.msra.mxu0 %v252
    %267 = vmatpush.msra.mxu0 %v251
    %268 = vmatpush.msra.mxu0 %v250
    %269 = vmatmul.f32.gmra.mxu0 %v228
    %v270 = vpop.f32.mrf.mxu0
    %v271 = vadd.f32 0.0, %v270
    %272 = vdwg.mxu0
    %v274 = vsel %vm226, %v199, 0
    %276 = vmatpush.msra.mxu0 0.0
    %277 = vmatpush.msra.mxu0 0.0
    %278 = vmatpush.msra.mxu0 0.0
    %279 = vmatpush.msra.mxu0 0.0
    %280 = vmatpush.msra.mxu0 0.0
    %281 = vmatpush.msra.mxu0 0.0
    %282 = vmatpush.msra.mxu0 0.0
    %283 = vmatpush.msra.mxu0 0.0
    %284 = vmatpush.msra.mxu0 0.0
    %285 = vmatpush.msra.mxu0 0.0
    %286 = vmatpush.msra.mxu0 0.0
    %287 = vmatpush.msra.mxu0 0.0
    %288 = vmatpush.msra.mxu0 0.0
    %289 = vmatpush.msra.mxu0 %v82
    %290 = vmatpush.msra.mxu0 %v81
    %291 = vmatpush.msra.mxu0 %v80
    %292 = vmatmul.f32.gmra.mxu0 %v274
    %v293 = vpop.f32.mrf.mxu0
    %v294 = vadd.f32 0.0, %v293
    %295 = vdwg.mxu0
    %v296 = vld [vmem:[%s5] sm:$0xff]
    %v297 = vld [vmem:[%s5 + $0x8] sm:$0xff]
    %v298 = vld [vmem:[%s5 + $0x10] sm:$0xff]
    %v300 = vsel %vm226, %v221, 0
    %302 = vmatpush.msra.mxu0 0.0
    %303 = vmatpush.msra.mxu0 0.0
    %304 = vmatpush.msra.mxu0 0.0
    %305 = vmatpush.msra.mxu0 0.0
    %306 = vmatpush.msra.mxu0 0.0
    %307 = vmatpush.msra.mxu0 0.0
    %308 = vmatpush.msra.mxu0 0.0
    %309 = vmatpush.msra.mxu0 0.0
    %310 = vmatpush.msra.mxu0 0.0
    %311 = vmatpush.msra.mxu0 0.0
    %312 = vmatpush.msra.mxu0 0.0
    %313 = vmatpush.msra.mxu0 0.0
    %314 = vmatpush.msra.mxu0 0.0
    %315 = vmatpush.msra.mxu0 %v298
    %316 = vmatpush.msra.mxu0 %v297
    %317 = vmatpush.msra.mxu0 %v296
    %318 = vmatmul.f32.gmra.mxu0 %v300
    %v319 = vpop.f32.mrf.mxu0
    %v320 = vadd.f32 0.0, %v319
    %321 = vdwg.mxu0
    %v323 = vsel %vm177, %v248, 0
    %325 = vmatpush.msra.mxu0 0.0
    %326 = vmatpush.msra.mxu0 0.0
    %327 = vmatpush.msra.mxu0 0.0
    %328 = vmatpush.msra.mxu0 0.0
    %329 = vmatpush.msra.mxu0 0.0
    %330 = vmatpush.msra.mxu0 0.0
    %331 = vmatpush.msra.mxu0 0.0
    %332 = vmatpush.msra.mxu0 0.0
    %333 = vmatpush.msra.mxu0 0.0
    %334 = vmatpush.msra.mxu0 0.0
    %335 = vmatpush.msra.mxu0 0.0
    %336 = vmatpush.msra.mxu0 0.0
    %337 = vmatpush.msra.mxu0 0.0
    %338 = vmatpush.msra.mxu0 0.0
    %339 = vmatpush.msra.mxu0 %v61
    %340 = vmatpush.msra.mxu0 %v60
    %341 = vmatmul.f32.gmra.mxu0 %v323
    %v342 = vpop.f32.mrf.mxu0
    %v343 = vadd.f32 0.0, %v342
    %344 = vdwg.mxu0
    %v345 = vld [vmem:[%s4] sm:$0xff]
    %v346 = vld [vmem:[%s4 + $0x8] sm:$0xff]
    %v348 = vsel %vm177, %v271, 0
    %350 = vmatpush.msra.mxu0 0.0
    %351 = vmatpush.msra.mxu0 0.0
    %352 = vmatpush.msra.mxu0 0.0
    %353 = vmatpush.msra.mxu0 0.0
    %354 = vmatpush.msra.mxu0 0.0
    %355 = vmatpush.msra.mxu0 0.0
    %356 = vmatpush.msra.mxu0 0.0
    %357 = vmatpush.msra.mxu0 0.0
    %358 = vmatpush.msra.mxu0 0.0
    %359 = vmatpush.msra.mxu0 0.0
    %360 = vmatpush.msra.mxu0 0.0
    %361 = vmatpush.msra.mxu0 0.0
    %362 = vmatpush.msra.mxu0 0.0
    %363 = vmatpush.msra.mxu0 0.0
    %364 = vmatpush.msra.mxu0 %v346
    %365 = vmatpush.msra.mxu0 %v345
    %366 = vmatmul.f32.gmra.mxu0 %v348
    %v367 = vpop.f32.mrf.mxu0
    %v368 = vadd.f32 0.0, %v367
    %369 = vdwg.mxu0
    %v370 = vld [vmem:[%s14] sm:$0xff]
    %v371 = vld [vmem:[%s14 + $0x8] sm:$0xff]
    %v372 = vld [vmem:[%s14 + $0x10] sm:$0xff]
    %v373 = vld [vmem:[%s14 + $0x18] sm:$0xff]
    %v374 = vld [vmem:[%s15] sm:$0x1]
    %v376 = vperm.slane %v374, 0
    %v379 = vsel %vm62, %v294, 0
    %v382 = vsel %vm62, %v320, 0
    %384 = vmatpush.msra.mxu0 0.0
    %385 = vmatpush.msra.mxu0 0.0
    %386 = vmatpush.msra.mxu0 0.0
    %387 = vmatpush.msra.mxu0 0.0
    %388 = vmatpush.msra.mxu0 0.0
    %389 = vmatpush.msra.mxu0 0.0
    %390 = vmatpush.msra.mxu0 0.0
    %391 = vmatpush.msra.mxu0 0.0
    %392 = vmatpush.msra.mxu0 0.0
    %393 = vmatpush.msra.mxu0 0.0
    %394 = vmatpush.msra.mxu0 0.0
    %395 = vmatpush.msra.mxu0 0.0
    %396 = vmatpush.msra.mxu0 %v373
    %397 = vmatpush.msra.mxu0 %v372
    %398 = vmatpush.msra.mxu0 %v371
    %399 = vmatpush.msra.mxu0 %v370
    %400 = vmatmul.f32.gmra.mxu0 %v379
    %v401 = vpop.f32.mrf.mxu0
    %v402 = vadd.f32 %v376, %v401
    %403 = vmatmul.f32.gmra.mxu0 %v382
    %v404 = vpop.f32.mrf.mxu0
    %v405 = vadd.f32 %v376, %v404
    %406 = vdwg.mxu0
    %v407 = vmax.f32 %v402, 0.0
    %v408 = vmax.f32 %v405, 0.0
    %v409 = vld [vmem:[%s16] sm:$0xff]
    %v410 = vld [vmem:[%s16 + $0x8] sm:$0xff]
    %v411 = vld [vmem:[%s16 + $0x10] sm:$0xff]
    %v412 = vld [vmem:[%s16 + $0x18] sm:$0xff]
    %v413 = vld [vmem:[%s17] sm:$0x1]
    %v415 = vperm.slane %v413, 0
    %v418 = vsel %vm62, %v343, 0
    %v421 = vsel %vm62, %v368, 0
    %423 = vmatpush.msra.mxu0 0.0
    %424 = vmatpush.msra.mxu0 0.0
    %425 = vmatpush.msra.mxu0 0.0
    %426 = vmatpush.msra.mxu0 0.0
    %427 = vmatpush.msra.mxu0 0.0
    %428 = vmatpush.msra.mxu0 0.0
    %429 = vmatpush.msra.mxu0 0.0
    %430 = vmatpush.msra.mxu0 0.0
    %431 = vmatpush.msra.mxu0 0.0
    %432 = vmatpush.msra.mxu0 0.0
    %433 = vmatpush.msra.mxu0 0.0
    %434 = vmatpush.msra.mxu0 0.0
    %435 = vmatpush.msra.mxu0 %v412
    %436 = vmatpush.msra.mxu0 %v411
    %437 = vmatpush.msra.mxu0 %v410
    %438 = vmatpush.msra.mxu0 %v409
    %439 = vmatmul.f32.gmra.mxu0 %v418
    %v440 = vpop.f32.mrf.mxu0
    %v441 = vadd.f32 %v415, %v440
    %442 = vmatmul.f32.gmra.mxu0 %v421
    %v443 = vpop.f32.mrf.mxu0
    %v444 = vadd.f32 %v415, %v443
    %445 = vdwg.mxu0
    %v446 = vmax.f32 %v441, 0.0
    %v447 = vmax.f32 %v444, 0.0
    %450 = vrot.lane.b32.xlu0 %v446, 32
    %v451 = vpop.permute.xlu0 %450
    %452 = vrot.lane.b32.xlu0 %v447, 32
    %v453 = vpop.permute.xlu0 %452
    %v456 = vsel %vm62, %v407, %v451
    %v457 = vsel %vm62, %v408, %v453
    %v458 = vld [vmem:[%s12] sm:$0xff]
    %v459 = vld [vmem:[%s12 + $0x8] sm:$0xff]
    %v460 = vld [vmem:[%s12 + $0x10] sm:$0xff]
    %v461 = vld [vmem:[%s12 + $0x18] sm:$0xff]
    %v462 = vld [vmem:[%s12 + $0x20] sm:$0xff]
    %v463 = vld [vmem:[%s12 + $0x28] sm:$0xff]
    %v464 = vld [vmem:[%s12 + $0x30] sm:$0xff]
    %v465 = vld [vmem:[%s12 + $0x38] sm:$0xff]
    %v466 = vld [vmem:[%s13] sm:$0x1]
    %v468 = vperm.slane %v466, 0
    %v471 = vsel %vm116, %v456, 0
    %v474 = vsel %vm116, %v457, 0
    %476 = vmatpush.msra.mxu0 0.0
    %477 = vmatpush.msra.mxu0 0.0
    %478 = vmatpush.msra.mxu0 0.0
    %479 = vmatpush.msra.mxu0 0.0
    %480 = vmatpush.msra.mxu0 0.0
    %481 = vmatpush.msra.mxu0 0.0
    %482 = vmatpush.msra.mxu0 0.0
    %483 = vmatpush.msra.mxu0 0.0
    %484 = vmatpush.msra.mxu0 %v465
    %485 = vmatpush.msra.mxu0 %v464
    %486 = vmatpush.msra.mxu0 %v463
    %487 = vmatpush.msra.mxu0 %v462
    %488 = vmatpush.msra.mxu0 %v461
    %489 = vmatpush.msra.mxu0 %v460
    %490 = vmatpush.msra.mxu0 %v459
    %491 = vmatpush.msra.mxu0 %v458
    %492 = vmatmul.f32.gmra.mxu0 %v471
    %v493 = vpop.f32.mrf.mxu0
    %v494 = vadd.f32 %v468, %v493
    %495 = vmatmul.f32.gmra.mxu0 %v474
    %v496 = vpop.f32.mrf.mxu0
    %v497 = vadd.f32 %v468, %v496
    %498 = vdwg.mxu0
    %v499 = vperm.slane %v158, 0
    %v500 = vxor.u32 %v494, 2147483648
    %v501 = vxor.u32 %v497, 2147483648
    %v502 = vmul.f32 %v500, 1.442695
    %v503 = vpow.pop %v502
    %v504 = vmul.f32 %v501, 1.442695
    %v505 = vpow.pop %v504
    %v506 = vadd.f32 %v503, 1.0
    %v507 = vadd.f32 %v505, 1.0
    %v508 = vrcp.pop %v506
    %v509 = vmul.f32 %v506, %v508
    %v510 = vsub.f32 1.0, %v509
    %v511 = vmul.f32 %v508, %v510
    %v512 = vadd.f32 %v508, %v511
    %vm513 = vweird.f32 %v506
    %vm514 = vweird.f32 %v508
    %vm515 = vmor %vm513, %vm514
    %v516 = vsel %vm515, %v508, %v512
    %v517 = vand.u32 2147483647, %v506
    %vm518 = vcmp.eq.f32.partialorder %v517, 8.507059e+37
    %v519 = vand.u32 %v506, 2147483648
    %v520 = vor.u32 1.1754944e-38, %v519
    %v521 = vsel %vm518, %v520, %v516
    %v522 = vmul.f32 1.0, %v521
    %v523 = vrcp.pop %v507
    %v524 = vmul.f32 %v507, %v523
    %v525 = vsub.f32 1.0, %v524
    %v526 = vmul.f32 %v523, %v525
    %v527 = vadd.f32 %v523, %v526
    %vm528 = vweird.f32 %v507
    %vm529 = vweird.f32 %v523
    %vm530 = vmor %vm528, %vm529
    %v531 = vsel %vm530, %v523, %v527
    %v532 = vand.u32 2147483647, %v507
    %vm533 = vcmp.eq.f32.partialorder %v532, 8.507059e+37
    %v534 = vand.u32 %v507, 2147483648
    %v535 = vor.u32 1.1754944e-38, %v534
    %v536 = vsel %vm533, %v535, %v531
    %v537 = vmul.f32 1.0, %v536
    %v538 = vmul.f32 %v499, %v522
    %v539 = vmul.f32 %v499, %v537
    %540 = vst.msk [vmem:[#allocation2] sm:$0xff] %vm62, %v538
    %541 = vst.msk [vmem:[#allocation2 + $0x8] sm:$0xff] %vm62, %v539
    // Predicated region
    $region74: #{tpu_custom_call.1} parent=1 // pred_check
      _
    $region75: #{tpu_custom_call.1} parent=1 // pred_check_branch
      %543 = sbr.rel (0) target = $region77
    $region76: #{tpu_custom_call.1} parent=1 // pred_region
      %545 = vsyncadd [#allocation3], 0
      %s546 = sshll.u32 [#allocation2], 4
      %s547 = int_to_ptr.vmem [resolvable:$true] %s546
      %s548 = sshll.u32 %s18, 4
      %s549 = int_to_ptr.hbm [resolvable:$true] %s548
      %554 = dma.vmem_to_hbm [thread:$0]  %s547, 256, %s549, [#allocation3], 128, 128, 8
    $region77: #{tpu_custom_call.1} parent=1 // pred_fallthru
      _
    // Predicated region
    $region78: #{tpu_custom_call.1} parent=1 // pred_check
      _
    $region79: #{tpu_custom_call.1} parent=1 // pred_check_branch
      %556 = sbr.rel (0) target = $region81
    $region80: #{tpu_custom_call.1} parent=1 // pred_region
      %558 = dma.done [#allocation3], 256
    $region81: #{tpu_custom_call.1} parent=1 // pred_fallthru
      _
    %559 = vsyncpa [#allocation3], 1

</llo_original>
